<compile_context>
chip_gen: v6e
topology: v6e:2x2x1
jax: 0.10.0
libtpu: 0.0.40
codegen_flags: <defaults>
</compile_context>

<pallas_src>
import jax
import jax.numpy as jnp
from jax.experimental import pallas as pl
from jax.experimental.pallas import tpu as pltpu


def _orthor_kernel(x_ref, w_ref, o_ref):
    # x_ref: (TB, C, H*W)   w_ref: (C, H*W) prescaled by 1/(H*W)   o_ref: (TB, C)
    x = x_ref[...].astype(jnp.float32)
    w = w_ref[...].astype(jnp.float32)
    # VPU multiply + one XLU reduction over the flattened H*W axis.
    o_ref[...] = jnp.sum(x * w[None, :, :], axis=-1).astype(o_ref.dtype)


def _round_up(x, m):
    return (x + m - 1) // m * m


def _pick_batch_tile(batch, c, hw, itemsize, target_bytes=4 << 20):
    """Batch tile sized for ~target_bytes of (vreg-padded) VMEM per buffer."""
    padded_row = _round_up(c, 8) * _round_up(hw, 128) * itemsize
    tb = max(1, target_bytes // padded_row)
    if tb >= batch:
        return batch
    # When the batch block is not the full axis, keep the second-to-last dim of
    # the (TB, C) output block a multiple of 8.
    return min(batch, max(8, (tb // 8) * 8))


@jax.jit
def orthor_transform_forward(feat, weight):
    """feat: (B, C, H, W); weight: (1, C, H, 1)  ->  (B, C)  (matches torch)."""
    B, C, H, W = feat.shape
    HW = H * W

    # Free flatten: H and W are the trailing contiguous dims.
    x = feat.reshape(B, C, HW)

    # Fold the mean's 1/(H*W) into the weight and pre-broadcast along W
    # (C*H*W elements only -- negligible glue work).
    w = (weight.reshape(C, H).astype(jnp.float32) / float(HW))
    w = jnp.broadcast_to(w[:, :, None], (C, H, W)).reshape(C, HW)

    TB = _pick_batch_tile(B, C, HW, jnp.dtype(feat.dtype).itemsize)
    grid = (pl.cdiv(B, TB),)

    return pl.pallas_call(
        _orthor_kernel,
        out_shape=jax.ShapeDtypeStruct((B, C), feat.dtype),
        grid=grid,
        in_specs=[
            # Batch-tiled feat: double-buffered HBM->VMEM pipeline.
            pl.BlockSpec((TB, C, HW), lambda i: (i, 0, 0)),
            # Small weight, same block every step (stays resident in VMEM).
            pl.BlockSpec((C, HW), lambda i: (0, 0)),
        ],
        # Output traffic is 1/(H*W) of the input traffic, so the (TB, C) store
        # (masked when C < 128) is a negligible fraction of the wall time.
        out_specs=pl.BlockSpec((TB, C), lambda i: (i, 0)),
        compiler_params=pltpu.CompilerParams(
            # Batch tiles are independent -> shard across both v7x TensorCores.
            dimension_semantics=("parallel",),
        ),
    )(x, w)


def reference_forward(feat, weight):
    pred = feat * jnp.broadcast_to(weight, feat.shape)
    return jnp.mean(jnp.mean(pred, axis=-1), axis=-1)


if __name__ == "__main__":
    key = jax.random.PRNGKey(0)
    k_feat, k_w = jax.random.split(key)

    B, c_dim, H, W = 2, 4, 5, 16  # module fixes weight H=5; W = feat_hw-ish width
    feat = jax.random.normal(k_feat, (B, c_dim, H, W), dtype=jnp.float32)
    # nn.Parameter(torch.randn(1, c_dim, 5, 1)) -> deterministic synthetic init
    weight = jax.random.normal(k_w, (1, c_dim, 5, 1), dtype=jnp.float32)

    out = jax.block_until_ready(orthor_transform_forward(feat, weight))
    ref = reference_forward(feat, weight)

    assert out.shape == (B, c_dim)
    assert jnp.allclose(out, ref, atol=1e-5, rtol=1e-5), (out, ref)

    print("KERNEL_OK")
</pallas_src>

<mosaic_0001>
module attributes {stable_mosaic.version = 11 : i64} {
  func.func @_orthor_kernel(%arg0: i32, %arg1: memref<2x4x80xf32, #tpu.memory_space<vmem>>, %arg2: memref<4x80xf32, #tpu.memory_space<vmem>>, %arg3: memref<2x4xf32, #tpu.memory_space<vmem>>) attributes {dimension_semantics = [#tpu.dimension_semantics<parallel>], iteration_bounds = array<i64: 1>, scalar_prefetch = 0 : i64, scratch_operands = 0 : i64, tpu.core_type = #tpu.core_type<tc>, window_params = [{transform_indices = @transform_0, window_bounds = array<i64: 2, 4, 80>}, {pipeline_mode = #tpu.pipeline_mode<synchronous>, transform_indices = @transform_1, window_bounds = array<i64: 4, 80>}, {transform_indices = @transform_2, window_bounds = array<i64: 2, 4>}]} {
    %c0 = arith.constant 0 : index
    %c0_0 = arith.constant 0 : index
    %c0_1 = arith.constant 0 : index
    %0 = vector.load %arg1[%c0, %c0_0, %c0_1] : memref<2x4x80xf32, #tpu.memory_space<vmem>>, vector<2x4x80xf32>
    %c0_2 = arith.constant 0 : index
    %c0_3 = arith.constant 0 : index
    %1 = vector.load %arg2[%c0_2, %c0_3] : memref<4x80xf32, #tpu.memory_space<vmem>>, vector<4x80xf32>
    %2 = vector.shape_cast %1 : vector<4x80xf32> to vector<1x4x80xf32>
    %3 = vector.broadcast %2 : vector<1x4x80xf32> to vector<2x4x80xf32>
    %4 = arith.mulf %0, %3 : vector<2x4x80xf32>
    %cst = arith.constant dense<0.000000e+00> : vector<2x4xf32>
    %5 = vector.multi_reduction <add>, %4, %cst [2] : vector<2x4x80xf32> to vector<2x4xf32>
    %c0_4 = arith.constant 0 : index
    %c0_5 = arith.constant 0 : index
    %6 = vector.load %arg3[%c0_4, %c0_5] : memref<2x4xf32, #tpu.memory_space<vmem>>, vector<2x4xf32>
    tpu.vector_store %arg3[%c0_4, %c0_5], %5 {strides = array<i32>} : memref<2x4xf32, #tpu.memory_space<vmem>>, vector<2x4xf32>,
    return
  }
  func.func @transform_0(%arg0: i32) -> (i32, i32, i32) {
    %c0_i32 = arith.constant 0 : i32
    %c0_i32_0 = arith.constant 0 : i32
    %c0_i32_1 = arith.constant 0 : i32
    return %arg0, %c0_i32, %c0_i32_0 : i32, i32, i32
  }
  func.func @transform_1(%arg0: i32) -> (i32, i32) {
    %c0_i32 = arith.constant 0 : i32
    %c0_i32_0 = arith.constant 0 : i32
    %c0_i32_1 = arith.constant 0 : i32
    return %c0_i32, %c0_i32_0 : i32, i32
  }
  func.func @transform_2(%arg0: i32) -> (i32, i32) {
    %c0_i32 = arith.constant 0 : i32
    %c0_i32_0 = arith.constant 0 : i32
    return %arg0, %c0_i32 : i32, i32
  }
}

</mosaic_0001>

<llo_original>
// kernel: orthor_transform_forward.1
$region0: #{orthor_transform_forward.1}
  #allocation0 [shape = 'u32[]', space=smem, size = 0x4, offset = 0x4, fixed_abs, tag = 'smem constant byte address 0x4 - core index']
  #allocation1 [shape = 'u32[144,128]{1,0:T(1,128)}', space=vmem, size = 0x12000, scoped, tag = 'internal scratch']
  %s0 = inlined_call_operand.vmem [shape: f32[2,4,80], index: 0, kind: input, shape index: {}]
  %s1 = inlined_call_operand.vmem [shape: f32[4,80], index: 1, kind: input, shape index: {}]
  %s2 = inlined_call_operand.hbm [shape: f32[2,4], index: 2, kind: output, shape index: {}]
  %s3 = sld [smem:[#allocation0]]
  $region18: #{orthor_transform_forward.1} parent=0
    _
  %s5 = ssub.s32 1, %s3
  %s6 = scalar_select 0, %s5, %s3
  $region1: #{orthor_transform_forward.1} parent=0
    #allocation2 [shape = 'u8[1024]{0}', space=vmem, size = 0x400, scoped, tag = 'output window, operand 0, single buffered']
    #allocation3 [shape = 's32[1]{0}', space=sflag, size = 0x4, scoped, tag = 'scoped memory for orthor_transform_forward.1']
    %7 = vsyncpa [#allocation3], 0
    // Predicated region
    $region2: #{orthor_transform_forward.1} parent=1 // pred_check
      _
    $region3: #{orthor_transform_forward.1} parent=1 // pred_check_branch
      %9 = sbr.rel (0) target = $region5
    $region4: #{orthor_transform_forward.1} parent=1 // pred_region
      _
    $region5: #{orthor_transform_forward.1} parent=1 // pred_fallthru
      _
    // Predicated region
    $region6: #{orthor_transform_forward.1} parent=1 // pred_check
      _
    $region7: #{orthor_transform_forward.1} parent=1 // pred_check_branch
      %11 = sbr.rel (0) target = $region9
    $region8: #{orthor_transform_forward.1} parent=1 // pred_region
      _
    $region9: #{orthor_transform_forward.1} parent=1 // pred_fallthru
      _
    %v12 = vld [vmem:[%s0] sm:$0xf]
    %v13 = vld [vmem:[%s0 + $0x4] sm:$0xf]
    %v14 = vld [vmem:[%s1] sm:$0xf]
    %v15 = vmul.f32 %v12, %v14
    %v16 = vmul.f32 %v13, %v14
    %vm17 = vcmask 650240
    %v18 = vsel %vm17, %v15, 0.0
    %19 = vadd.xlane.f32.xlu0 %v18
    %v20 = vpop.xlane.xlu0 %19
    %v21 = vsel %vm17, %v16, 0.0
    %22 = vadd.xlane.f32.xlu0 %v21
    %v23 = vpop.xlane.xlu0 %22
    %v26 = vlaneseq
    %v27 = vand.u32 %v26, 127
    %v28 = vlaneseq
    %v29 = vshrl.u32 %v28, 7
    %v30 = vsub.s32 %v27, %v29
    %v31 = vrot.slane %v20, %v30
    %v32 = vlaneseq
    %v33 = vshrl.u32 %v32, 7
    %v34 = vsub.s32 %v27, %v33
    %v35 = vrot.slane %v23, %v34
    %vm36 = vcmask 1041409
    %v37 = vsel %vm36, %v35, %v31
    %vm39 = vcmask 25600
    %40 = vst.msk [vmem:[#allocation2] sm:$0x3] %vm39, %v37
    // Predicated region
    $region10: #{orthor_transform_forward.1} parent=1 // pred_check
      _
    $region11: #{orthor_transform_forward.1} parent=1 // pred_check_branch
      %42 = sbr.rel (0) target = $region13
    $region12: #{orthor_transform_forward.1} parent=1 // pred_region
      %s44 = ssub.s32 32, 32
      %45 = vsyncadd [#allocation3], %s44
      %s47 = sshll.u32 [#allocation2], 4
      %s48 = int_to_ptr.vmem [resolvable:$true] %s47
      %50 = dma.vmem_to_hbm [thread:$0]  %s48, 32, %s2, [#allocation3]
    $region13: #{orthor_transform_forward.1} parent=1 // pred_fallthru
      _
    // Predicated region
    $region14: #{orthor_transform_forward.1} parent=1 // pred_check
      _
    $region15: #{orthor_transform_forward.1} parent=1 // pred_check_branch
      %52 = sbr.rel (0) target = $region17
    $region16: #{orthor_transform_forward.1} parent=1 // pred_region
      %53 = dma.done [#allocation3], 32
    $region17: #{orthor_transform_forward.1} parent=1 // pred_fallthru
      _
    %54 = vsyncpa [#allocation3], 1

</llo_original>
